<compile_context>
chip_gen: v6e
topology: v6e:2x2x1
jax: 0.10.0
libtpu: 0.0.40
codegen_flags: <defaults>
</compile_context>

<pallas_src>
import math
import numpy as np
import jax
import jax.numpy as jnp
from jax.experimental import pallas as pl
from jax.experimental.pallas import tpu as pltpu

# ----------------------- diffusion constants (cosine schedule) ---------------
TIMESTEPS = 1000
ACTION_DIM = 11
IMAGE_SIZE = 16
IMG_CH = 4
HIDDEN = 32
TEMB = 16

# packed "small" input column layout: [action | temb | 1 | noise | sa | sb | 0-pad]
IDX_TEMB = ACTION_DIM                    # 11
IDX_VALID = IDX_TEMB + TEMB              # 27  (ones for real rows -> bias row)
IDX_NOISE = IDX_VALID + 1                # 28
IDX_SA = IDX_NOISE + ACTION_DIM          # 39
IDX_SB = IDX_SA + 1                      # 40
SMALL_RAW = IDX_SB + 1                   # 41
SMALL_W = 128                            # lane-dense padded width

MAX_TILE = 2048                          # rows per grid step (8-aligned)


def cosine_beta_schedule(timesteps, s=0.008):
    steps = timesteps + 1
    x = np.linspace(0, timesteps, steps, dtype=np.float64)
    alphas_cumprod = np.cos((x / timesteps + s) / (1 + s) * math.pi * 0.5) ** 2
    alphas_cumprod = alphas_cumprod / alphas_cumprod[0]
    betas = 1 - alphas_cumprod[1:] / alphas_cumprod[:-1]
    return np.clip(betas, 0, 0.999)


_betas = cosine_beta_schedule(TIMESTEPS)
_alphas = 1.0 - _betas
_alphas_cumprod = np.cumprod(_alphas)
SQRT_ALPHAS_CUMPROD = jnp.asarray(np.sqrt(_alphas_cumprod), dtype=jnp.float32)
SQRT_ONE_MINUS_ALPHAS_CUMPROD = jnp.asarray(
    np.sqrt(1.0 - _alphas_cumprod), dtype=jnp.float32)


def time_embedding(t, dim=TEMB):
    """Sinusoidal timestep embedding (plain-JAX glue)."""
    half = dim // 2
    freqs = jnp.exp(-math.log(10000.0) *
                    jnp.arange(half, dtype=jnp.float32) / half)
    args = t.astype(jnp.float32)[:, None] * freqs[None, :]
    return jnp.concatenate([jnp.sin(args), jnp.cos(args)], axis=-1)


def _round_up(x, m):
    return ((x + m - 1) // m) * m


# ----------------------------- Pallas kernel ---------------------------------
def cddpm_loss_kernel(img_ref, small_ref, wpool_ref, wsmall_ref, w2_ref,
                      b2_ref, wcol_ref, masks_ref, out_ref):
    s = small_ref[...]                                   # (TB, 128) f32
    sa = s[:, IDX_SA:IDX_SA + 1]                         # (TB, 1)
    sb = s[:, IDX_SB:IDX_SB + 1]                         # (TB, 1)
    valid = s[:, IDX_VALID:IDX_VALID + 1]                # (TB, 1)
    target = s[:, 0:ACTION_DIM]                          # (TB, 11) action_start

    # q_sample folded into a per-column scale of the packed small activation:
    #   cols [0..10]  -> sa*action   (weight rows = w_act)
    #   cols [11..27] -> temb, ones  (weight rows = w_t ; b1)
    #   cols [28..38] -> sb*noise    (weight rows = w_act again)
    #   cols [39..]   -> scale 0     (weight rows are zero -> no effect)
    m = masks_ref[...]                                   # (3, 128) constant masks
    scale = m[0:1, :] * sa + m[1:2, :] + m[2:3, :] * sb  # (TB, 128)
    small_act = (s * scale).astype(jnp.bfloat16)

    # fused first layer: K=1024 bf16 GEMM (global-avg-pool folded into w_pool)
    # plus the packed 128-column small GEMM; f32 accumulation throughout.
    img_bf16 = img_ref[...].astype(jnp.bfloat16)
    h = (jnp.dot(img_bf16, wpool_ref[...],
                 preferred_element_type=jnp.float32)
         + jnp.dot(small_act, wsmall_ref[...],
                   preferred_element_type=jnp.float32))
    h = jnp.maximum(h, 0.0)
    z = jnp.dot(h.astype(jnp.bfloat16), w2_ref[...],
                preferred_element_type=jnp.float32) + b2_ref[...]   # (TB, 11)

    # pred_x0 loss: 0.1*BCEWithLogits(discrete).mean() + 0.9*MSE(cont).mean()
    y = target
    bce = jnp.maximum(z, 0.0) - z * y + jnp.log1p(jnp.exp(-jnp.abs(z)))
    mse = (z - y) * (z - y)
    wb = wcol_ref[0:1, :]                                # 0.1/9 on discrete cols
    wm = wcol_ref[1:2, :]                                # 0.9/2 on continuous cols
    partial = jnp.sum((bce * wb + mse * wm) * valid)     # per-tile partial

    # lane-dense per-tile output (wrapper divides by real batch and sums)
    out_ref[...] = partial * jnp.ones(out_ref.shape, dtype=jnp.float32)


# ------------------------------- wrapper --------------------------------------
def init_params(key):
    k1, k2, k3, k4 = jax.random.split(key, 4)
    scale = 0.1
    w_img = scale * jax.random.normal(k1, (IMG_CH, HIDDEN), dtype=jnp.float32)
    w_act = scale * jax.random.normal(k2, (ACTION_DIM, HIDDEN), dtype=jnp.float32)
    w_t = scale * jax.random.normal(k3, (TEMB, HIDDEN), dtype=jnp.float32)
    b1 = jnp.zeros((1, HIDDEN), dtype=jnp.float32)
    w2 = scale * jax.random.normal(k4, (HIDDEN, ACTION_DIM), dtype=jnp.float32)
    b2 = jnp.zeros((1, ACTION_DIM), dtype=jnp.float32)
    return (w_img, w_act, w_t, b1, w2, b2)


def action_gaussian_diffusion_forward(params, img, action, t, noise):
    w_img, w_act, w_t, b1, w2, b2 = params
    b, c, h, w = img.shape
    assert h == IMAGE_SIZE and w == IMAGE_SIZE, \
        f"Image height and width must be {IMAGE_SIZE}"
    hw = h * w
    k_img = c * hw

    # --- image operand: lane-dense (b, c*h*w) f32 slab (bf16 cast happens
    # in-kernel to avoid an extra HBM read+write pass); pool folded into the
    # bf16 weight (rows repeated hw times and scaled by 1/hw) ---
    img2d = img.reshape(b, k_img)
    w_pool = (jnp.repeat(w_img, hw, axis=0) / hw).astype(jnp.bfloat16)  # (k_img, H)

    # --- schedule gather + t-embedding (plain-JAX glue) ---
    sa = SQRT_ALPHAS_CUMPROD[t].reshape(b, 1)
    sb = SQRT_ONE_MINUS_ALPHAS_CUMPROD[t].reshape(b, 1)
    temb = time_embedding(t)                                            # (b, 16)

    # --- packed small operand: [action | temb | 1 | noise | sa | sb | 0-pad]
    # padded to a full 128-lane width for unmasked DMA / VPU work. ---
    ones = jnp.ones((b, 1), jnp.float32)
    small = jnp.concatenate(
        [action.astype(jnp.float32), temb, ones,
         noise.astype(jnp.float32), sa, sb], axis=-1)                   # (b, 41)
    small = jnp.pad(small, ((0, 0), (0, SMALL_W - SMALL_RAW)))          # (b, 128)

    # --- fused small weight: [w_act; w_t; b1; w_act; 0...] -> (128, 32) bf16 ---
    w_small = jnp.concatenate(
        [w_act, w_t, b1, w_act,
         jnp.zeros((SMALL_W - IDX_SA, HIDDEN), jnp.float32)],
        axis=0).astype(jnp.bfloat16)

    # --- constant column masks for the q_sample scale (replaces iota+where) ---
    cols128 = np.arange(SMALL_W)
    mask_act = (cols128 < ACTION_DIM).astype(np.float32)
    mask_temb = ((cols128 >= IDX_TEMB) & (cols128 < IDX_NOISE)).astype(np.float32)
    mask_noise = ((cols128 >= IDX_NOISE) & (cols128 < IDX_SA)).astype(np.float32)
    masks = jnp.asarray(np.stack([mask_act, mask_temb, mask_noise]),
                        dtype=jnp.float32)                              # (3, 128)

    # --- per-column loss weights ---
    colsA = np.arange(ACTION_DIM)
    disc = ((colsA < 8) | (colsA == 10)).astype(np.float32) * (0.1 / 9.0)
    cont = ((colsA == 8) | (colsA == 9)).astype(np.float32) * (0.9 / 2.0)
    wcol = jnp.asarray(np.stack([disc, cont]), dtype=jnp.float32)       # (2, 11)

    # --- batch tiling: single tile only for tiny batches; otherwise >= 2 tiles
    # (so both v7x TensorCores get work and DMA/compute overlap), with rows
    # capped at MAX_TILE=2048 (f32 img tile 8 MiB -> 16 MiB double-buffered,
    # well under the vmem limit below).  Padded rows carry valid==0 (jnp.pad
    # zero-fills sa/sb/valid) so they contribute nothing to the loss. ---
    if b <= 16:
        tb = max(8, _round_up(b, 8))
    else:
        n_tiles_target = max(2, pl.cdiv(b, MAX_TILE))
        tb = min(MAX_TILE, _round_up(pl.cdiv(b, n_tiles_target), 8))
    padded_b = _round_up(b, tb)
    if padded_b != b:
        img2d = jnp.pad(img2d, ((0, padded_b - b), (0, 0)))
        small = jnp.pad(small, ((0, padded_b - b), (0, 0)))
    num_tiles = padded_b // tb

    partials = pl.pallas_call(
        cddpm_loss_kernel,
        out_shape=jax.ShapeDtypeStruct((num_tiles, 1, 128), jnp.float32),
        grid=(num_tiles,),
        in_specs=[
            pl.BlockSpec((tb, k_img), lambda i: (i, 0)),            # img (f32)
            pl.BlockSpec((tb, SMALL_W), lambda i: (i, 0)),          # packed small
            pl.BlockSpec((k_img, HIDDEN), lambda i: (0, 0)),        # w_pool (bf16)
            pl.BlockSpec((SMALL_W, HIDDEN), lambda i: (0, 0)),      # w_small (bf16)
            pl.BlockSpec((HIDDEN, ACTION_DIM), lambda i: (0, 0)),   # w2 (bf16)
            pl.BlockSpec((1, ACTION_DIM), lambda i: (0, 0)),        # b2
            pl.BlockSpec((2, ACTION_DIM), lambda i: (0, 0)),        # wcol
            pl.BlockSpec((3, SMALL_W), lambda i: (0, 0)),           # scale masks
        ],
        out_specs=pl.BlockSpec((1, 1, 128), lambda i: (i, 0, 0)),
        compiler_params=pltpu.CompilerParams(
            dimension_semantics=("parallel",),
            vmem_limit_bytes=48 * 1024 * 1024),
    )(img2d, small, w_pool, w_small, w2.astype(jnp.bfloat16), b2, wcol, masks)

    # final combine (per-tile partials already carry 0.1/9 and 0.9/2 weights)
    return jnp.sum(partials[:, 0, 0]) / b


# --------------------------------- main ----------------------------------------
if __name__ == "__main__":
    key = jax.random.PRNGKey(0)
    k_img, k_act, k_noise, k_params = jax.random.split(key, 4)

    batch = 2
    img = jax.random.normal(k_img, (batch, IMG_CH, IMAGE_SIZE, IMAGE_SIZE),
                            dtype=jnp.float32)
    action = jax.random.normal(k_act, (batch, ACTION_DIM), dtype=jnp.float32)
    # deterministic timesteps (forward would otherwise draw randint(0, T))
    t = jnp.array([17, 503], dtype=jnp.int32)
    # deterministic noise (p_losses would otherwise draw randn_like(action))
    noise = jax.random.normal(k_noise, (batch, ACTION_DIM), dtype=jnp.float32)

    params = init_params(k_params)

    loss = action_gaussian_diffusion_forward(params, img, action, t, noise)
    jax.block_until_ready(loss)
    assert loss.shape == () and jnp.isfinite(loss)
    print("KERNEL_OK")
</pallas_src>

<mosaic_0001>
module attributes {stable_mosaic.version = 11 : i64} {
  func.func @cddpm_loss_kernel(%arg0: i32, %arg1: memref<8x1024xf32, #tpu.memory_space<vmem>>, %arg2: memref<8x128xf32, #tpu.memory_space<vmem>>, %arg3: memref<1024x32xbf16, #tpu.memory_space<vmem>>, %arg4: memref<128x32xbf16, #tpu.memory_space<vmem>>, %arg5: memref<32x11xbf16, #tpu.memory_space<vmem>>, %arg6: memref<1x11xf32, #tpu.memory_space<vmem>>, %arg7: memref<2x11xf32, #tpu.memory_space<vmem>>, %arg8: memref<3x128xf32, #tpu.memory_space<vmem>>, %arg9: memref<1x1x128xf32, #tpu.memory_space<vmem>>) attributes {dimension_semantics = [#tpu.dimension_semantics<parallel>], iteration_bounds = array<i64: 1>, scalar_prefetch = 0 : i64, scratch_operands = 0 : i64, tpu.core_type = #tpu.core_type<tc>, window_params = [{transform_indices = @transform_0, window_bounds = array<i64: 8, 1024>}, {transform_indices = @transform_1, window_bounds = array<i64: 8, 128>}, {pipeline_mode = #tpu.pipeline_mode<synchronous>, transform_indices = @transform_2, window_bounds = array<i64: 1024, 32>}, {pipeline_mode = #tpu.pipeline_mode<synchronous>, transform_indices = @transform_3, window_bounds = array<i64: 128, 32>}, {pipeline_mode = #tpu.pipeline_mode<synchronous>, transform_indices = @transform_4, window_bounds = array<i64: 32, 11>}, {pipeline_mode = #tpu.pipeline_mode<synchronous>, transform_indices = @transform_5, window_bounds = array<i64: 1, 11>}, {pipeline_mode = #tpu.pipeline_mode<synchronous>, transform_indices = @transform_6, window_bounds = array<i64: 2, 11>}, {pipeline_mode = #tpu.pipeline_mode<synchronous>, transform_indices = @transform_7, window_bounds = array<i64: 3, 128>}, {transform_indices = @transform_8, window_bounds = array<i64: 1, 1, 128>}]} {
    %c0 = arith.constant 0 : index
    %c0_0 = arith.constant 0 : index
    %0 = vector.load %arg2[%c0, %c0_0] : memref<8x128xf32, #tpu.memory_space<vmem>>, vector<8x128xf32>
    %1 = vector.extract_strided_slice %0 {offsets = [0, 39], sizes = [8, 1], strides = [1, 1]} : vector<8x128xf32> to vector<8x1xf32>
    %2 = vector.extract_strided_slice %0 {offsets = [0, 40], sizes = [8, 1], strides = [1, 1]} : vector<8x128xf32> to vector<8x1xf32>
    %3 = vector.extract_strided_slice %0 {offsets = [0, 27], sizes = [8, 1], strides = [1, 1]} : vector<8x128xf32> to vector<8x1xf32>
    %4 = vector.extract_strided_slice %0 {offsets = [0, 0], sizes = [8, 11], strides = [1, 1]} : vector<8x128xf32> to vector<8x11xf32>
    %c0_1 = arith.constant 0 : index
    %c0_2 = arith.constant 0 : index
    %5 = vector.load %arg8[%c0_1, %c0_2] : memref<3x128xf32, #tpu.memory_space<vmem>>, vector<3x128xf32>
    %6 = vector.extract_strided_slice %5 {offsets = [0, 0], sizes = [1, 128], strides = [1, 1]} : vector<3x128xf32> to vector<1x128xf32>
    %7 = vector.broadcast %6 : vector<1x128xf32> to vector<8x128xf32>
    %8 = vector.broadcast %1 : vector<8x1xf32> to vector<8x128xf32>
    %9 = arith.mulf %7, %8 : vector<8x128xf32>
    %10 = vector.extract_strided_slice %5 {offsets = [1, 0], sizes = [1, 128], strides = [1, 1]} : vector<3x128xf32> to vector<1x128xf32>
    %11 = vector.broadcast %10 : vector<1x128xf32> to vector<8x128xf32>
    %12 = arith.addf %9, %11 : vector<8x128xf32>
    %13 = vector.extract_strided_slice %5 {offsets = [2, 0], sizes = [1, 128], strides = [1, 1]} : vector<3x128xf32> to vector<1x128xf32>
    %14 = vector.broadcast %13 : vector<1x128xf32> to vector<8x128xf32>
    %15 = vector.broadcast %2 : vector<8x1xf32> to vector<8x128xf32>
    %16 = arith.mulf %14, %15 : vector<8x128xf32>
    %17 = arith.addf %12, %16 : vector<8x128xf32>
    %18 = arith.mulf %0, %17 : vector<8x128xf32>
    %19 = arith.truncf %18 : vector<8x128xf32> to vector<8x128xbf16>
    %c0_3 = arith.constant 0 : index
    %c0_4 = arith.constant 0 : index
    %20 = vector.load %arg1[%c0_3, %c0_4] : memref<8x1024xf32, #tpu.memory_space<vmem>>, vector<8x1024xf32>
    %21 = arith.truncf %20 : vector<8x1024xf32> to vector<8x1024xbf16>
    %c0_5 = arith.constant 0 : index
    %c0_6 = arith.constant 0 : index
    %22 = vector.load %arg3[%c0_5, %c0_6] : memref<1024x32xbf16, #tpu.memory_space<vmem>>, vector<1024x32xbf16>
    %cst = arith.constant dense<0.000000e+00> : vector<8x32xf32>
    %23 = tpu.matmul %21, %22, %cst {dimension_numbers = #tpu.dot_dimension_numbers<[1], [0], [0], [1], [0, 0, 1, 1], [], []>} : vector<8x1024xbf16>, vector<1024x32xbf16>, vector<8x32xf32> -> vector<8x32xf32>
    %c0_7 = arith.constant 0 : index
    %c0_8 = arith.constant 0 : index
    %24 = vector.load %arg4[%c0_7, %c0_8] : memref<128x32xbf16, #tpu.memory_space<vmem>>, vector<128x32xbf16>
    %cst_9 = arith.constant dense<0.000000e+00> : vector<8x32xf32>
    %25 = tpu.matmul %19, %24, %cst_9 {dimension_numbers = #tpu.dot_dimension_numbers<[1], [0], [0], [1], [0, 0, 1, 1], [], []>} : vector<8x128xbf16>, vector<128x32xbf16>, vector<8x32xf32> -> vector<8x32xf32>
    %26 = arith.addf %23, %25 : vector<8x32xf32>
    %cst_10 = arith.constant 0.000000e+00 : f32
    %27 = vector.broadcast %cst_10 : f32 to vector<8x32xf32>
    %28 = arith.maximumf %26, %27 : vector<8x32xf32>
    %29 = arith.truncf %28 : vector<8x32xf32> to vector<8x32xbf16>
    %c0_11 = arith.constant 0 : index
    %c0_12 = arith.constant 0 : index
    %30 = vector.load %arg5[%c0_11, %c0_12] : memref<32x11xbf16, #tpu.memory_space<vmem>>, vector<32x11xbf16>
    %cst_13 = arith.constant dense<0.000000e+00> : vector<8x11xf32>
    %31 = tpu.matmul %29, %30, %cst_13 {dimension_numbers = #tpu.dot_dimension_numbers<[1], [0], [0], [1], [0, 0, 1, 1], [], []>} : vector<8x32xbf16>, vector<32x11xbf16>, vector<8x11xf32> -> vector<8x11xf32>
    %c0_14 = arith.constant 0 : index
    %c0_15 = arith.constant 0 : index
    %32 = vector.load %arg6[%c0_14, %c0_15] : memref<1x11xf32, #tpu.memory_space<vmem>>, vector<1x11xf32>
    %33 = vector.broadcast %32 : vector<1x11xf32> to vector<8x11xf32>
    %34 = arith.addf %31, %33 : vector<8x11xf32>
    %cst_16 = arith.constant 0.000000e+00 : f32
    %35 = vector.broadcast %cst_16 : f32 to vector<8x11xf32>
    %36 = arith.maximumf %34, %35 : vector<8x11xf32>
    %37 = arith.mulf %34, %4 : vector<8x11xf32>
    %38 = arith.subf %36, %37 : vector<8x11xf32>
    %39 = math.absf %34 : vector<8x11xf32>
    %cst_17 = arith.constant 0.000000e+00 : f32
    %40 = vector.broadcast %cst_17 : f32 to vector<8x11xf32>
    %41 = arith.subf %40, %39 : vector<8x11xf32>
    %42 = math.exp %41 : vector<8x11xf32>
    %43 = math.log1p %42 : vector<8x11xf32>
    %44 = arith.addf %38, %43 : vector<8x11xf32>
    %45 = arith.subf %34, %4 : vector<8x11xf32>
    %46 = arith.subf %34, %4 : vector<8x11xf32>
    %47 = arith.mulf %45, %46 : vector<8x11xf32>
    %c0_18 = arith.constant 0 : index
    %c0_19 = arith.constant 0 : index
    %48 = vector.load %arg7[%c0_18, %c0_19] : memref<2x11xf32, #tpu.memory_space<vmem>>, vector<1x11xf32>
    %c1 = arith.constant 1 : index
    %c0_20 = arith.constant 0 : index
    %49 = vector.load %arg7[%c1, %c0_20] : memref<2x11xf32, #tpu.memory_space<vmem>>, vector<1x11xf32>
    %50 = vector.broadcast %48 : vector<1x11xf32> to vector<8x11xf32>
    %51 = arith.mulf %44, %50 : vector<8x11xf32>
    %52 = vector.broadcast %49 : vector<1x11xf32> to vector<8x11xf32>
    %53 = arith.mulf %47, %52 : vector<8x11xf32>
    %54 = arith.addf %51, %53 : vector<8x11xf32>
    %55 = vector.broadcast %3 : vector<8x1xf32> to vector<8x11xf32>
    %56 = arith.mulf %54, %55 : vector<8x11xf32>
    %57 = vector.shape_cast %56 : vector<8x11xf32> to vector<1x8x11xf32>
    %cst_21 = arith.constant dense<0.000000e+00> : vector<1xf32>
    %58 = vector.multi_reduction <add>, %57, %cst_21 [1, 2] : vector<1x8x11xf32> to vector<1xf32>
    %59 = vector.shape_cast %58 : vector<1xf32> to vector<1x1x1xf32>
    %60 = vector.extract %59[0, 0, 0] : f32 from vector<1x1x1xf32>
    %cst_22 = arith.constant 1.000000e+00 : f32
    %61 = vector.broadcast %cst_22 : f32 to vector<1x1x128xf32>
    %62 = vector.broadcast %60 : f32 to vector<1x1x128xf32>
    %63 = arith.mulf %62, %61 : vector<1x1x128xf32>
    %c0_23 = arith.constant 0 : index
    %c0_24 = arith.constant 0 : index
    %c0_25 = arith.constant 0 : index
    %64 = vector.load %arg9[%c0_23, %c0_24, %c0_25] : memref<1x1x128xf32, #tpu.memory_space<vmem>>, vector<1x1x128xf32>
    tpu.vector_store %arg9[%c0_23, %c0_24, %c0_25], %63 {strides = array<i32>} : memref<1x1x128xf32, #tpu.memory_space<vmem>>, vector<1x1x128xf32>,
    return
  }
  func.func @transform_0(%arg0: i32) -> (i32, i32) {
    %c0_i32 = arith.constant 0 : i32
    %c0_i32_0 = arith.constant 0 : i32
    return %arg0, %c0_i32 : i32, i32
  }
  func.func @transform_1(%arg0: i32) -> (i32, i32) {
    %c0_i32 = arith.constant 0 : i32
    %c0_i32_0 = arith.constant 0 : i32
    return %arg0, %c0_i32 : i32, i32
  }
  func.func @transform_2(%arg0: i32) -> (i32, i32) {
    %c0_i32 = arith.constant 0 : i32
    %c0_i32_0 = arith.constant 0 : i32
    %c0_i32_1 = arith.constant 0 : i32
    return %c0_i32, %c0_i32_0 : i32, i32
  }
  func.func @transform_3(%arg0: i32) -> (i32, i32) {
    %c0_i32 = arith.constant 0 : i32
    %c0_i32_0 = arith.constant 0 : i32
    %c0_i32_1 = arith.constant 0 : i32
    return %c0_i32, %c0_i32_0 : i32, i32
  }
  func.func @transform_4(%arg0: i32) -> (i32, i32) {
    %c0_i32 = arith.constant 0 : i32
    %c0_i32_0 = arith.constant 0 : i32
    %c0_i32_1 = arith.constant 0 : i32
    return %c0_i32, %c0_i32_0 : i32, i32
  }
  func.func @transform_5(%arg0: i32) -> (i32, i32) {
    %c0_i32 = arith.constant 0 : i32
    %c0_i32_0 = arith.constant 0 : i32
    %c0_i32_1 = arith.constant 0 : i32
    return %c0_i32, %c0_i32_0 : i32, i32
  }
  func.func @transform_6(%arg0: i32) -> (i32, i32) {
    %c0_i32 = arith.constant 0 : i32
    %c0_i32_0 = arith.constant 0 : i32
    %c0_i32_1 = arith.constant 0 : i32
    return %c0_i32, %c0_i32_0 : i32, i32
  }
  func.func @transform_7(%arg0: i32) -> (i32, i32) {
    %c0_i32 = arith.constant 0 : i32
    %c0_i32_0 = arith.constant 0 : i32
    %c0_i32_1 = arith.constant 0 : i32
    return %c0_i32, %c0_i32_0 : i32, i32
  }
  func.func @transform_8(%arg0: i32) -> (i32, i32, i32) {
    %c0_i32 = arith.constant 0 : i32
    %c0_i32_0 = arith.constant 0 : i32
    %c0_i32_1 = arith.constant 0 : i32
    return %arg0, %c0_i32, %c0_i32_0 : i32, i32, i32
  }
}

</mosaic_0001>

<llo_original>
// kernel: tpu_custom_call.1
$region0: #{tpu_custom_call.1}
  #allocation0 [shape = 'u32[]', space=smem, size = 0x4, offset = 0x4, fixed_abs, tag = 'smem constant byte address 0x4 - core index']
  #allocation1 [shape = 'u32[144,128]{1,0:T(1,128)}', space=vmem, size = 0x12000, scoped, tag = 'internal scratch']
  %s0 = inlined_call_operand.vmem [shape: f32[8,1024], index: 0, kind: input, shape index: {}]
  %s1 = inlined_call_operand.vmem [shape: f32[8,128], index: 1, kind: input, shape index: {}]
  %s2 = inlined_call_operand.vmem [shape: bf16[1024,32], index: 2, kind: input, shape index: {}]
  %s3 = inlined_call_operand.vmem [shape: bf16[128,32], index: 3, kind: input, shape index: {}]
  %s4 = inlined_call_operand.vmem [shape: bf16[32,11], index: 4, kind: input, shape index: {}]
  %s5 = inlined_call_operand.vmem [shape: f32[1,11], index: 5, kind: input, shape index: {}]
  %s6 = inlined_call_operand.vmem [shape: f32[2,11], index: 6, kind: input, shape index: {}]
  %s7 = inlined_call_operand.vmem [shape: f32[3,128], index: 7, kind: input, shape index: {}]
  %s8 = inlined_call_operand.hbm [shape: f32[1,1,128], index: 8, kind: output, shape index: {}]
  %s9 = sld [smem:[#allocation0]]
  $region42: #{tpu_custom_call.1} parent=0
    _
  %s11 = ssub.s32 1, %s9
  %s12 = scalar_select 0, %s11, %s9
  $region1: #{tpu_custom_call.1} parent=0
    #allocation2 [shape = 'u8[512]{0}', space=vmem, size = 0x400, scoped, tag = 'output window, operand 0, single buffered']
    #allocation3 [shape = 's32[1]{0}', space=sflag, size = 0x4, scoped, tag = 'scoped memory for tpu_custom_call.1']
    %13 = vsyncpa [#allocation3], 0
    // Predicated region
    $region2: #{tpu_custom_call.1} parent=1 // pred_check
      _
    $region3: #{tpu_custom_call.1} parent=1 // pred_check_branch
      %15 = sbr.rel (0) target = $region5
    $region4: #{tpu_custom_call.1} parent=1 // pred_region
      _
    $region5: #{tpu_custom_call.1} parent=1 // pred_fallthru
      _
    // Predicated region
    $region6: #{tpu_custom_call.1} parent=1 // pred_check
      _
    $region7: #{tpu_custom_call.1} parent=1 // pred_check_branch
      %17 = sbr.rel (0) target = $region9
    $region8: #{tpu_custom_call.1} parent=1 // pred_region
      _
    $region9: #{tpu_custom_call.1} parent=1 // pred_fallthru
      _
    // Predicated region
    $region10: #{tpu_custom_call.1} parent=1 // pred_check
      _
    $region11: #{tpu_custom_call.1} parent=1 // pred_check_branch
      %19 = sbr.rel (0) target = $region13
    $region12: #{tpu_custom_call.1} parent=1 // pred_region
      _
    $region13: #{tpu_custom_call.1} parent=1 // pred_fallthru
      _
    // Predicated region
    $region14: #{tpu_custom_call.1} parent=1 // pred_check
      _
    $region15: #{tpu_custom_call.1} parent=1 // pred_check_branch
      %21 = sbr.rel (0) target = $region17
    $region16: #{tpu_custom_call.1} parent=1 // pred_region
      _
    $region17: #{tpu_custom_call.1} parent=1 // pred_fallthru
      _
    // Predicated region
    $region18: #{tpu_custom_call.1} parent=1 // pred_check
      _
    $region19: #{tpu_custom_call.1} parent=1 // pred_check_branch
      %23 = sbr.rel (0) target = $region21
    $region20: #{tpu_custom_call.1} parent=1 // pred_region
      _
    $region21: #{tpu_custom_call.1} parent=1 // pred_fallthru
      _
    // Predicated region
    $region22: #{tpu_custom_call.1} parent=1 // pred_check
      _
    $region23: #{tpu_custom_call.1} parent=1 // pred_check_branch
      %25 = sbr.rel (0) target = $region25
    $region24: #{tpu_custom_call.1} parent=1 // pred_region
      _
    $region25: #{tpu_custom_call.1} parent=1 // pred_fallthru
      _
    // Predicated region
    $region26: #{tpu_custom_call.1} parent=1 // pred_check
      _
    $region27: #{tpu_custom_call.1} parent=1 // pred_check_branch
      %27 = sbr.rel (0) target = $region29
    $region28: #{tpu_custom_call.1} parent=1 // pred_region
      _
    $region29: #{tpu_custom_call.1} parent=1 // pred_fallthru
      _
    // Predicated region
    $region30: #{tpu_custom_call.1} parent=1 // pred_check
      _
    $region31: #{tpu_custom_call.1} parent=1 // pred_check_branch
      %29 = sbr.rel (0) target = $region33
    $region32: #{tpu_custom_call.1} parent=1 // pred_region
      _
    $region33: #{tpu_custom_call.1} parent=1 // pred_fallthru
      _
    %v31 = vld [vmem:[%s1] sm:$0xff]
    %v32 = vld [vmem:[%s7] sm:$0x7]
    %v33 = vlaneseq
    %v34 = vshrl.u32 %v33, 7
    %v35 = vsub.s32 0, %v34
    %v36 = vrot.slane %v32, %v35
    %38 = vset.pattern.permute.xlu0 39
    %39 = vperm.xlu0 %38, %v31
    %v40 = vpop.permute.xlu0 %39
    %v42 = vmul.f32 %v36, %v40
    %v43 = vlaneseq
    %v44 = vshrl.u32 %v43, 7
    %v45 = vsub.s32 1, %v44
    %v46 = vrot.slane %v32, %v45
    %v47 = vadd.f32 %v42, %v46
    %v48 = vlaneseq
    %v49 = vshrl.u32 %v48, 7
    %v50 = vsub.s32 2, %v49
    %v51 = vrot.slane %v32, %v50
    %52 = vset.pattern.permute.xlu0 40
    %53 = vperm.xlu0 %52, %v31
    %v54 = vpop.permute.xlu0 %53
    %v56 = vmul.f32 %v51, %v54
    %v57 = vadd.f32 %v47, %v56
    %v58 = vmul.f32 %v31, %v57
    %v59 = vpack.c.bf16 %v58, %v58
    %v60 = vld [vmem:[%s0] sm:$0xff]
    %v61 = vld [vmem:[%s0 + $0x8] sm:$0xff]
    %v62 = vld [vmem:[%s0 + $0x10] sm:$0xff]
    %v63 = vld [vmem:[%s0 + $0x18] sm:$0xff]
    %v64 = vld [vmem:[%s0 + $0x20] sm:$0xff]
    %v65 = vld [vmem:[%s0 + $0x28] sm:$0xff]
    %v66 = vld [vmem:[%s0 + $0x30] sm:$0xff]
    %v67 = vld [vmem:[%s0 + $0x38] sm:$0xff]
    %v68 = vpack.c.bf16 %v60, %v60
    %v69 = vpack.c.bf16 %v61, %v61
    %v70 = vpack.c.bf16 %v62, %v62
    %v71 = vpack.c.bf16 %v63, %v63
    %v72 = vpack.c.bf16 %v64, %v64
    %v73 = vpack.c.bf16 %v65, %v65
    %v74 = vpack.c.bf16 %v66, %v66
    %v75 = vpack.c.bf16 %v67, %v67
    %v76 = vld [vmem:[%s2] sm:$0xf]
    %v77 = vld [vmem:[%s2 + $0x4] sm:$0xf]
    %v78 = vld [vmem:[%s2 + $0x8] sm:$0xf]
    %v79 = vld [vmem:[%s2 + $0xc] sm:$0xf]
    %v80 = vld [vmem:[%s2 + $0x10] sm:$0xf]
    %v81 = vld [vmem:[%s2 + $0x14] sm:$0xf]
    %v82 = vld [vmem:[%s2 + $0x18] sm:$0xf]
    %v83 = vld [vmem:[%s2 + $0x1c] sm:$0xf]
    %v84 = vld [vmem:[%s2 + $0x20] sm:$0xf]
    %v85 = vld [vmem:[%s2 + $0x24] sm:$0xf]
    %v86 = vld [vmem:[%s2 + $0x28] sm:$0xf]
    %v87 = vld [vmem:[%s2 + $0x2c] sm:$0xf]
    %v88 = vld [vmem:[%s2 + $0x30] sm:$0xf]
    %v89 = vld [vmem:[%s2 + $0x34] sm:$0xf]
    %v90 = vld [vmem:[%s2 + $0x38] sm:$0xf]
    %v91 = vld [vmem:[%s2 + $0x3c] sm:$0xf]
    %v92 = vld [vmem:[%s2 + $0x40] sm:$0xf]
    %v93 = vld [vmem:[%s2 + $0x44] sm:$0xf]
    %v94 = vld [vmem:[%s2 + $0x48] sm:$0xf]
    %v95 = vld [vmem:[%s2 + $0x4c] sm:$0xf]
    %v96 = vld [vmem:[%s2 + $0x50] sm:$0xf]
    %v97 = vld [vmem:[%s2 + $0x54] sm:$0xf]
    %v98 = vld [vmem:[%s2 + $0x58] sm:$0xf]
    %v99 = vld [vmem:[%s2 + $0x5c] sm:$0xf]
    %v100 = vld [vmem:[%s2 + $0x60] sm:$0xf]
    %v101 = vld [vmem:[%s2 + $0x64] sm:$0xf]
    %v102 = vld [vmem:[%s2 + $0x68] sm:$0xf]
    %v103 = vld [vmem:[%s2 + $0x6c] sm:$0xf]
    %v104 = vld [vmem:[%s2 + $0x70] sm:$0xf]
    %v105 = vld [vmem:[%s2 + $0x74] sm:$0xf]
    %v106 = vld [vmem:[%s2 + $0x78] sm:$0xf]
    %v107 = vld [vmem:[%s2 + $0x7c] sm:$0xf]
    %v108 = vld [vmem:[%s2 + $0x80] sm:$0xf]
    %v109 = vld [vmem:[%s2 + $0x84] sm:$0xf]
    %v110 = vld [vmem:[%s2 + $0x88] sm:$0xf]
    %v111 = vld [vmem:[%s2 + $0x8c] sm:$0xf]
    %v112 = vld [vmem:[%s2 + $0x90] sm:$0xf]
    %v113 = vld [vmem:[%s2 + $0x94] sm:$0xf]
    %v114 = vld [vmem:[%s2 + $0x98] sm:$0xf]
    %v115 = vld [vmem:[%s2 + $0x9c] sm:$0xf]
    %v116 = vld [vmem:[%s2 + $0xa0] sm:$0xf]
    %v117 = vld [vmem:[%s2 + $0xa4] sm:$0xf]
    %v118 = vld [vmem:[%s2 + $0xa8] sm:$0xf]
    %v119 = vld [vmem:[%s2 + $0xac] sm:$0xf]
    %v120 = vld [vmem:[%s2 + $0xb0] sm:$0xf]
    %v121 = vld [vmem:[%s2 + $0xb4] sm:$0xf]
    %v122 = vld [vmem:[%s2 + $0xb8] sm:$0xf]
    %v123 = vld [vmem:[%s2 + $0xbc] sm:$0xf]
    %v124 = vld [vmem:[%s2 + $0xc0] sm:$0xf]
    %v125 = vld [vmem:[%s2 + $0xc4] sm:$0xf]
    %v126 = vld [vmem:[%s2 + $0xc8] sm:$0xf]
    %v127 = vld [vmem:[%s2 + $0xcc] sm:$0xf]
    %v128 = vld [vmem:[%s2 + $0xd0] sm:$0xf]
    %v129 = vld [vmem:[%s2 + $0xd4] sm:$0xf]
    %v130 = vld [vmem:[%s2 + $0xd8] sm:$0xf]
    %v131 = vld [vmem:[%s2 + $0xdc] sm:$0xf]
    %v132 = vld [vmem:[%s2 + $0xe0] sm:$0xf]
    %v133 = vld [vmem:[%s2 + $0xe4] sm:$0xf]
    %v134 = vld [vmem:[%s2 + $0xe8] sm:$0xf]
    %v135 = vld [vmem:[%s2 + $0xec] sm:$0xf]
    %v136 = vld [vmem:[%s2 + $0xf0] sm:$0xf]
    %v137 = vld [vmem:[%s2 + $0xf4] sm:$0xf]
    %v138 = vld [vmem:[%s2 + $0xf8] sm:$0xf]
    %v139 = vld [vmem:[%s2 + $0xfc] sm:$0xf]
    %v140 = vld [vmem:[%s2 + $0x100] sm:$0xf]
    %v141 = vld [vmem:[%s2 + $0x104] sm:$0xf]
    %v142 = vld [vmem:[%s2 + $0x108] sm:$0xf]
    %v143 = vld [vmem:[%s2 + $0x10c] sm:$0xf]
    %v144 = vld [vmem:[%s2 + $0x110] sm:$0xf]
    %v145 = vld [vmem:[%s2 + $0x114] sm:$0xf]
    %v146 = vld [vmem:[%s2 + $0x118] sm:$0xf]
    %v147 = vld [vmem:[%s2 + $0x11c] sm:$0xf]
    %v148 = vld [vmem:[%s2 + $0x120] sm:$0xf]
    %v149 = vld [vmem:[%s2 + $0x124] sm:$0xf]
    %v150 = vld [vmem:[%s2 + $0x128] sm:$0xf]
    %v151 = vld [vmem:[%s2 + $0x12c] sm:$0xf]
    %v152 = vld [vmem:[%s2 + $0x130] sm:$0xf]
    %v153 = vld [vmem:[%s2 + $0x134] sm:$0xf]
    %v154 = vld [vmem:[%s2 + $0x138] sm:$0xf]
    %v155 = vld [vmem:[%s2 + $0x13c] sm:$0xf]
    %v156 = vld [vmem:[%s2 + $0x140] sm:$0xf]
    %v157 = vld [vmem:[%s2 + $0x144] sm:$0xf]
    %v158 = vld [vmem:[%s2 + $0x148] sm:$0xf]
    %v159 = vld [vmem:[%s2 + $0x14c] sm:$0xf]
    %v160 = vld [vmem:[%s2 + $0x150] sm:$0xf]
    %v161 = vld [vmem:[%s2 + $0x154] sm:$0xf]
    %v162 = vld [vmem:[%s2 + $0x158] sm:$0xf]
    %v163 = vld [vmem:[%s2 + $0x15c] sm:$0xf]
    %v164 = vld [vmem:[%s2 + $0x160] sm:$0xf]
    %v165 = vld [vmem:[%s2 + $0x164] sm:$0xf]
    %v166 = vld [vmem:[%s2 + $0x168] sm:$0xf]
    %v167 = vld [vmem:[%s2 + $0x16c] sm:$0xf]
    %v168 = vld [vmem:[%s2 + $0x170] sm:$0xf]
    %v169 = vld [vmem:[%s2 + $0x174] sm:$0xf]
    %v170 = vld [vmem:[%s2 + $0x178] sm:$0xf]
    %v171 = vld [vmem:[%s2 + $0x17c] sm:$0xf]
    %v172 = vld [vmem:[%s2 + $0x180] sm:$0xf]
    %v173 = vld [vmem:[%s2 + $0x184] sm:$0xf]
    %v174 = vld [vmem:[%s2 + $0x188] sm:$0xf]
    %v175 = vld [vmem:[%s2 + $0x18c] sm:$0xf]
    %v176 = vld [vmem:[%s2 + $0x190] sm:$0xf]
    %v177 = vld [vmem:[%s2 + $0x194] sm:$0xf]
    %v178 = vld [vmem:[%s2 + $0x198] sm:$0xf]
    %v179 = vld [vmem:[%s2 + $0x19c] sm:$0xf]
    %v180 = vld [vmem:[%s2 + $0x1a0] sm:$0xf]
    %v181 = vld [vmem:[%s2 + $0x1a4] sm:$0xf]
    %v182 = vld [vmem:[%s2 + $0x1a8] sm:$0xf]
    %v183 = vld [vmem:[%s2 + $0x1ac] sm:$0xf]
    %v184 = vld [vmem:[%s2 + $0x1b0] sm:$0xf]
    %v185 = vld [vmem:[%s2 + $0x1b4] sm:$0xf]
    %v186 = vld [vmem:[%s2 + $0x1b8] sm:$0xf]
    %v187 = vld [vmem:[%s2 + $0x1bc] sm:$0xf]
    %v188 = vld [vmem:[%s2 + $0x1c0] sm:$0xf]
    %v189 = vld [vmem:[%s2 + $0x1c4] sm:$0xf]
    %v190 = vld [vmem:[%s2 + $0x1c8] sm:$0xf]
    %v191 = vld [vmem:[%s2 + $0x1cc] sm:$0xf]
    %v192 = vld [vmem:[%s2 + $0x1d0] sm:$0xf]
    %v193 = vld [vmem:[%s2 + $0x1d4] sm:$0xf]
    %v194 = vld [vmem:[%s2 + $0x1d8] sm:$0xf]
    %v195 = vld [vmem:[%s2 + $0x1dc] sm:$0xf]
    %v196 = vld [vmem:[%s2 + $0x1e0] sm:$0xf]
    %v197 = vld [vmem:[%s2 + $0x1e4] sm:$0xf]
    %v198 = vld [vmem:[%s2 + $0x1e8] sm:$0xf]
    %v199 = vld [vmem:[%s2 + $0x1ec] sm:$0xf]
    %v200 = vld [vmem:[%s2 + $0x1f0] sm:$0xf]
    %v201 = vld [vmem:[%s2 + $0x1f4] sm:$0xf]
    %v202 = vld [vmem:[%s2 + $0x1f8] sm:$0xf]
    %v203 = vld [vmem:[%s2 + $0x1fc] sm:$0xf]
    %v204 = vld [vmem:[%s3] sm:$0xf]
    %v205 = vld [vmem:[%s3 + $0x4] sm:$0xf]
    %v206 = vld [vmem:[%s3 + $0x8] sm:$0xf]
    %v207 = vld [vmem:[%s3 + $0xc] sm:$0xf]
    %v208 = vld [vmem:[%s3 + $0x10] sm:$0xf]
    %v209 = vld [vmem:[%s3 + $0x14] sm:$0xf]
    %v210 = vld [vmem:[%s3 + $0x18] sm:$0xf]
    %v211 = vld [vmem:[%s3 + $0x1c] sm:$0xf]
    %v212 = vld [vmem:[%s3 + $0x20] sm:$0xf]
    %v213 = vld [vmem:[%s3 + $0x24] sm:$0xf]
    %v214 = vld [vmem:[%s3 + $0x28] sm:$0xf]
    %v215 = vld [vmem:[%s3 + $0x2c] sm:$0xf]
    %v216 = vld [vmem:[%s3 + $0x30] sm:$0xf]
    %v217 = vld [vmem:[%s3 + $0x34] sm:$0xf]
    %v218 = vld [vmem:[%s3 + $0x38] sm:$0xf]
    %v219 = vld [vmem:[%s3 + $0x3c] sm:$0xf]
    %v236 = vunpack.c.l.b16 %v204
    %v237 = vunpack.c.l.b16 %v205
    %v238 = vunpack.c.l.b16 %v206
    %v239 = vunpack.c.l.b16 %v207
    %v240 = vunpack.c.l.b16 %v208
    %v241 = vunpack.c.l.b16 %v209
    %v242 = vunpack.c.l.b16 %v210
    %v243 = vunpack.c.l.b16 %v211
    %v244 = vunpack.c.l.b16 %v212
    %v245 = vunpack.c.l.b16 %v213
    %v246 = vunpack.c.l.b16 %v214
    %v247 = vunpack.c.l.b16 %v215
    %v248 = vunpack.c.l.b16 %v216
    %v249 = vunpack.c.l.b16 %v217
    %v250 = vunpack.c.l.b16 %v218
    %v251 = vunpack.c.l.b16 %v219
    %v252 = vpack.c.b16 %v237, %v236
    %v253 = vpack.c.b16 %v239, %v238
    %v254 = vpack.c.b16 %v241, %v240
    %v255 = vpack.c.b16 %v243, %v242
    %v256 = vpack.c.b16 %v245, %v244
    %v257 = vpack.c.b16 %v247, %v246
    %v258 = vpack.c.b16 %v249, %v248
    %v259 = vpack.c.b16 %v251, %v250
    %268 = vmatprep.subr.bf16.mxu0 0
    %269 = vmatpush1.bf16.msra.mxu0 %v259
    %270 = vmatprep.subr.bf16.mxu0 0
    %271 = vmatpush1.bf16.msra.mxu0 %v258
    %272 = vmatprep.subr.bf16.mxu0 0
    %273 = vmatpush1.bf16.msra.mxu0 %v257
    %274 = vmatprep.subr.bf16.mxu0 0
    %275 = vmatpush1.bf16.msra.mxu0 %v256
    %276 = vmatprep.subr.bf16.mxu0 0
    %277 = vmatpush1.bf16.msra.mxu0 %v255
    %278 = vmatprep.subr.bf16.mxu0 0
    %279 = vmatpush1.bf16.msra.mxu0 %v254
    %280 = vmatprep.subr.bf16.mxu0 0
    %281 = vmatpush1.bf16.msra.mxu0 %v253
    %282 = vmatprep.subr.bf16.mxu0 0
    %283 = vmatpush1.bf16.msra.mxu0 %v252
    %284 = vmatprep.subr.bf16.mxu0 0
    %285 = vmatpush2.bf16.msra.mxu0 0
    %286 = vmatprep.subr.bf16.mxu0 0
    %287 = vmatpush2.bf16.msra.mxu0 0
    %288 = vmatprep.subr.bf16.mxu0 0
    %289 = vmatpush2.bf16.msra.mxu0 0
    %290 = vmatprep.subr.bf16.mxu0 0
    %291 = vmatpush2.bf16.msra.mxu0 0
    %292 = vmatprep.subr.bf16.mxu0 0
    %293 = vmatpush2.bf16.msra.mxu0 0
    %294 = vmatprep.subr.bf16.mxu0 0
    %295 = vmatpush2.bf16.msra.mxu0 0
    %296 = vmatprep.subr.bf16.mxu0 0
    %297 = vmatpush2.bf16.msra.mxu0 0
    %298 = vmatprep.subr.bf16.mxu0 0
    %299 = vmatpush2.bf16.msra.mxu0 0
    %300 = vmatprep.mubr.bf16.mxu0 0
    %301 = vmatmul.mubr.bf16.gmra.mxu0 %v59
    %v302 = vpop.f32.mrf.mxu0
    %v303 = vadd.f32 0.0, %v302
    %v304 = vpop.f32.mrf.mxu0
    %v305 = vpop.f32.mrf.mxu0
    %v306 = vpop.f32.mrf.mxu0
    %307 = vdwg.mxu0
    %v436 = vunpack.c.l.b16 %v76
    %v437 = vunpack.c.l.b16 %v77
    %v438 = vunpack.c.l.b16 %v78
    %v439 = vunpack.c.l.b16 %v79
    %v440 = vunpack.c.l.b16 %v80
    %v441 = vunpack.c.l.b16 %v81
    %v442 = vunpack.c.l.b16 %v82
    %v443 = vunpack.c.l.b16 %v83
    %v444 = vunpack.c.l.b16 %v84
    %v445 = vunpack.c.l.b16 %v85
    %v446 = vunpack.c.l.b16 %v86
    %v447 = vunpack.c.l.b16 %v87
    %v448 = vunpack.c.l.b16 %v88
    %v449 = vunpack.c.l.b16 %v89
    %v450 = vunpack.c.l.b16 %v90
    %v451 = vunpack.c.l.b16 %v91
    %v452 = vunpack.c.l.b16 %v92
    %v453 = vunpack.c.l.b16 %v93
    %v454 = vunpack.c.l.b16 %v94
    %v455 = vunpack.c.l.b16 %v95
    %v456 = vunpack.c.l.b16 %v96
    %v457 = vunpack.c.l.b16 %v97
    %v458 = vunpack.c.l.b16 %v98
    %v459 = vunpack.c.l.b16 %v99
    %v460 = vunpack.c.l.b16 %v100
    %v461 = vunpack.c.l.b16 %v101
    %v462 = vunpack.c.l.b16 %v102
    %v463 = vunpack.c.l.b16 %v103
    %v464 = vunpack.c.l.b16 %v104
    %v465 = vunpack.c.l.b16 %v105
    %v466 = vunpack.c.l.b16 %v106
    %v467 = vunpack.c.l.b16 %v107
    %v468 = vunpack.c.l.b16 %v108
    %v469 = vunpack.c.l.b16 %v109
    %v470 = vunpack.c.l.b16 %v110
    %v471 = vunpack.c.l.b16 %v111
    %v472 = vunpack.c.l.b16 %v112
    %v473 = vunpack.c.l.b16 %v113
    %v474 = vunpack.c.l.b16 %v114
    %v475 = vunpack.c.l.b16 %v115
    %v476 = vunpack.c.l.b16 %v116
    %v477 = vunpack.c.l.b16 %v117
    %v478 = vunpack.c.l.b16 %v118
    %v479 = vunpack.c.l.b16 %v119
    %v480 = vunpack.c.l.b16 %v120
    %v481 = vunpack.c.l.b16 %v121
    %v482 = vunpack.c.l.b16 %v122
    %v483 = vunpack.c.l.b16 %v123
    %v484 = vunpack.c.l.b16 %v124
    %v485 = vunpack.c.l.b16 %v125
    %v486 = vunpack.c.l.b16 %v126
    %v487 = vunpack.c.l.b16 %v127
    %v488 = vunpack.c.l.b16 %v128
    %v489 = vunpack.c.l.b16 %v129
    %v490 = vunpack.c.l.b16 %v130
    %v491 = vunpack.c.l.b16 %v131
    %v492 = vunpack.c.l.b16 %v132
    %v493 = vunpack.c.l.b16 %v133
    %v494 = vunpack.c.l.b16 %v134
    %v495 = vunpack.c.l.b16 %v135
    %v496 = vunpack.c.l.b16 %v136
    %v497 = vunpack.c.l.b16 %v137
    %v498 = vunpack.c.l.b16 %v138
    %v499 = vunpack.c.l.b16 %v139
    %v500 = vunpack.c.l.b16 %v140
    %v501 = vunpack.c.l.b16 %v141
    %v502 = vunpack.c.l.b16 %v142
    %v503 = vunpack.c.l.b16 %v143
    %v504 = vunpack.c.l.b16 %v144
    %v505 = vunpack.c.l.b16 %v145
    %v506 = vunpack.c.l.b16 %v146
    %v507 = vunpack.c.l.b16 %v147
    %v508 = vunpack.c.l.b16 %v148
    %v509 = vunpack.c.l.b16 %v149
    %v510 = vunpack.c.l.b16 %v150
    %v511 = vunpack.c.l.b16 %v151
    %v512 = vunpack.c.l.b16 %v152
    %v513 = vunpack.c.l.b16 %v153
    %v514 = vunpack.c.l.b16 %v154
    %v515 = vunpack.c.l.b16 %v155
    %v516 = vunpack.c.l.b16 %v156
    %v517 = vunpack.c.l.b16 %v157
    %v518 = vunpack.c.l.b16 %v158
    %v519 = vunpack.c.l.b16 %v159
    %v520 = vunpack.c.l.b16 %v160
    %v521 = vunpack.c.l.b16 %v161
    %v522 = vunpack.c.l.b16 %v162
    %v523 = vunpack.c.l.b16 %v163
    %v524 = vunpack.c.l.b16 %v164
    %v525 = vunpack.c.l.b16 %v165
    %v526 = vunpack.c.l.b16 %v166
    %v527 = vunpack.c.l.b16 %v167
    %v528 = vunpack.c.l.b16 %v168
    %v529 = vunpack.c.l.b16 %v169
    %v530 = vunpack.c.l.b16 %v170
    %v531 = vunpack.c.l.b16 %v171
    %v532 = vunpack.c.l.b16 %v172
    %v533 = vunpack.c.l.b16 %v173
    %v534 = vunpack.c.l.b16 %v174
    %v535 = vunpack.c.l.b16 %v175
    %v536 = vunpack.c.l.b16 %v176
    %v537 = vunpack.c.l.b16 %v177
    %v538 = vunpack.c.l.b16 %v178
    %v539 = vunpack.c.l.b16 %v179
    %v540 = vunpack.c.l.b16 %v180
    %v541 = vunpack.c.l.b16 %v181
    %v542 = vunpack.c.l.b16 %v182
    %v543 = vunpack.c.l.b16 %v183
    %v544 = vunpack.c.l.b16 %v184
    %v545 = vunpack.c.l.b16 %v185
    %v546 = vunpack.c.l.b16 %v186
    %v547 = vunpack.c.l.b16 %v187
    %v548 = vunpack.c.l.b16 %v188
    %v549 = vunpack.c.l.b16 %v189
    %v550 = vunpack.c.l.b16 %v190
    %v551 = vunpack.c.l.b16 %v191
    %v552 = vunpack.c.l.b16 %v192
    %v553 = vunpack.c.l.b16 %v193
    %v554 = vunpack.c.l.b16 %v194
    %v555 = vunpack.c.l.b16 %v195
    %v556 = vunpack.c.l.b16 %v196
    %v557 = vunpack.c.l.b16 %v197
    %v558 = vunpack.c.l.b16 %v198
    %v559 = vunpack.c.l.b16 %v199
    %v560 = vunpack.c.l.b16 %v200
    %v561 = vunpack.c.l.b16 %v201
    %v562 = vunpack.c.l.b16 %v202
    %v563 = vunpack.c.l.b16 %v203
    %v564 = vpack.c.b16 %v437, %v436
    %v565 = vpack.c.b16 %v439, %v438
    %v566 = vpack.c.b16 %v441, %v440
    %v567 = vpack.c.b16 %v443, %v442
    %v568 = vpack.c.b16 %v445, %v444
    %v569 = vpack.c.b16 %v447, %v446
    %v570 = vpack.c.b16 %v449, %v448
    %v571 = vpack.c.b16 %v451, %v450
    %v572 = vpack.c.b16 %v453, %v452
    %v573 = vpack.c.b16 %v455, %v454
    %v574 = vpack.c.b16 %v457, %v456
    %v575 = vpack.c.b16 %v459, %v458
    %v576 = vpack.c.b16 %v461, %v460
    %v577 = vpack.c.b16 %v463, %v462
    %v578 = vpack.c.b16 %v465, %v464
    %v579 = vpack.c.b16 %v467, %v466
    %v580 = vpack.c.b16 %v469, %v468
    %v581 = vpack.c.b16 %v471, %v470
    %v582 = vpack.c.b16 %v473, %v472
    %v583 = vpack.c.b16 %v475, %v474
    %v584 = vpack.c.b16 %v477, %v476
    %v585 = vpack.c.b16 %v479, %v478
    %v586 = vpack.c.b16 %v481, %v480
    %v587 = vpack.c.b16 %v483, %v482
    %v588 = vpack.c.b16 %v485, %v484
    %v589 = vpack.c.b16 %v487, %v486
    %v590 = vpack.c.b16 %v489, %v488
    %v591 = vpack.c.b16 %v491, %v490
    %v592 = vpack.c.b16 %v493, %v492
    %v593 = vpack.c.b16 %v495, %v494
    %v594 = vpack.c.b16 %v497, %v496
    %v595 = vpack.c.b16 %v499, %v498
    %v596 = vpack.c.b16 %v501, %v500
    %v597 = vpack.c.b16 %v503, %v502
    %v598 = vpack.c.b16 %v505, %v504
    %v599 = vpack.c.b16 %v507, %v506
    %v600 = vpack.c.b16 %v509, %v508
    %v601 = vpack.c.b16 %v511, %v510
    %v602 = vpack.c.b16 %v513, %v512
    %v603 = vpack.c.b16 %v515, %v514
    %v604 = vpack.c.b16 %v517, %v516
    %v605 = vpack.c.b16 %v519, %v518
    %v606 = vpack.c.b16 %v521, %v520
    %v607 = vpack.c.b16 %v523, %v522
    %v608 = vpack.c.b16 %v525, %v524
    %v609 = vpack.c.b16 %v527, %v526
    %v610 = vpack.c.b16 %v529, %v528
    %v611 = vpack.c.b16 %v531, %v530
    %v612 = vpack.c.b16 %v533, %v532
    %v613 = vpack.c.b16 %v535, %v534
    %v614 = vpack.c.b16 %v537, %v536
    %v615 = vpack.c.b16 %v539, %v538
    %v616 = vpack.c.b16 %v541, %v540
    %v617 = vpack.c.b16 %v543, %v542
    %v618 = vpack.c.b16 %v545, %v544
    %v619 = vpack.c.b16 %v547, %v546
    %v620 = vpack.c.b16 %v549, %v548
    %v621 = vpack.c.b16 %v551, %v550
    %v622 = vpack.c.b16 %v553, %v552
    %v623 = vpack.c.b16 %v555, %v554
    %v624 = vpack.c.b16 %v557, %v556
    %v625 = vpack.c.b16 %v559, %v558
    %v626 = vpack.c.b16 %v561, %v560
    %v627 = vpack.c.b16 %v563, %v562
    %692 = vmatprep.subr.bf16.mxu0 0
    %693 = vmatpush1.bf16.msra.mxu0 %v571
    %694 = vmatprep.subr.bf16.mxu0 0
    %695 = vmatpush1.bf16.msra.mxu0 %v570
    %696 = vmatprep.subr.bf16.mxu0 0
    %697 = vmatpush1.bf16.msra.mxu0 %v569
    %698 = vmatprep.subr.bf16.mxu0 0
    %699 = vmatpush1.bf16.msra.mxu0 %v568
    %700 = vmatprep.subr.bf16.mxu0 0
    %701 = vmatpush1.bf16.msra.mxu0 %v567
    %702 = vmatprep.subr.bf16.mxu0 0
    %703 = vmatpush1.bf16.msra.mxu0 %v566
    %704 = vmatprep.subr.bf16.mxu0 0
    %705 = vmatpush1.bf16.msra.mxu0 %v565
    %706 = vmatprep.subr.bf16.mxu0 0
    %707 = vmatpush1.bf16.msra.mxu0 %v564
    %708 = vmatprep.subr.bf16.mxu0 0
    %709 = vmatpush2.bf16.msra.mxu0 %v579
    %710 = vmatprep.subr.bf16.mxu0 0
    %711 = vmatpush2.bf16.msra.mxu0 %v578
    %712 = vmatprep.subr.bf16.mxu0 0
    %713 = vmatpush2.bf16.msra.mxu0 %v577
    %714 = vmatprep.subr.bf16.mxu0 0
    %715 = vmatpush2.bf16.msra.mxu0 %v576
    %716 = vmatprep.subr.bf16.mxu0 0
    %717 = vmatpush2.bf16.msra.mxu0 %v575
    %718 = vmatprep.subr.bf16.mxu0 0
    %719 = vmatpush2.bf16.msra.mxu0 %v574
    %720 = vmatprep.subr.bf16.mxu0 0
    %721 = vmatpush2.bf16.msra.mxu0 %v573
    %722 = vmatprep.subr.bf16.mxu0 0
    %723 = vmatpush2.bf16.msra.mxu0 %v572
    %724 = vmatprep.mubr.bf16.mxu0 %v69
    %725 = vmatmul.mubr.bf16.gmra.mxu0 %v68
    %v726 = vpop.f32.mrf.mxu0
    %v727 = vadd.f32 %v303, %v726
    %v728 = vpop.f32.mrf.mxu0
    %v729 = vpop.f32.mrf.mxu0
    %v730 = vpop.f32.mrf.mxu0
    %731 = vdwg.mxu0
    %732 = vmatprep.subr.bf16.mxu0 0
    %733 = vmatpush1.bf16.msra.mxu0 %v587
    %734 = vmatprep.subr.bf16.mxu0 0
    %735 = vmatpush1.bf16.msra.mxu0 %v586
    %736 = vmatprep.subr.bf16.mxu0 0
    %737 = vmatpush1.bf16.msra.mxu0 %v585
    %738 = vmatprep.subr.bf16.mxu0 0
    %739 = vmatpush1.bf16.msra.mxu0 %v584
    %740 = vmatprep.subr.bf16.mxu0 0
    %741 = vmatpush1.bf16.msra.mxu0 %v583
    %742 = vmatprep.subr.bf16.mxu0 0
    %743 = vmatpush1.bf16.msra.mxu0 %v582
    %744 = vmatprep.subr.bf16.mxu0 0
    %745 = vmatpush1.bf16.msra.mxu0 %v581
    %746 = vmatprep.subr.bf16.mxu0 0
    %747 = vmatpush1.bf16.msra.mxu0 %v580
    %748 = vmatprep.subr.bf16.mxu0 0
    %749 = vmatpush2.bf16.msra.mxu0 %v595
    %750 = vmatprep.subr.bf16.mxu0 0
    %751 = vmatpush2.bf16.msra.mxu0 %v594
    %752 = vmatprep.subr.bf16.mxu0 0
    %753 = vmatpush2.bf16.msra.mxu0 %v593
    %754 = vmatprep.subr.bf16.mxu0 0
    %755 = vmatpush2.bf16.msra.mxu0 %v592
    %756 = vmatprep.subr.bf16.mxu0 0
    %757 = vmatpush2.bf16.msra.mxu0 %v591
    %758 = vmatprep.subr.bf16.mxu0 0
    %759 = vmatpush2.bf16.msra.mxu0 %v590
    %760 = vmatprep.subr.bf16.mxu0 0
    %761 = vmatpush2.bf16.msra.mxu0 %v589
    %762 = vmatprep.subr.bf16.mxu0 0
    %763 = vmatpush2.bf16.msra.mxu0 %v588
    %764 = vmatprep.mubr.bf16.mxu0 %v71
    %765 = vmatmul.mubr.bf16.gmra.mxu0 %v70
    %v766 = vpop.f32.mrf.mxu0
    %v767 = vadd.f32 %v727, %v766
    %v768 = vpop.f32.mrf.mxu0
    %v769 = vpop.f32.mrf.mxu0
    %v770 = vpop.f32.mrf.mxu0
    %771 = vdwg.mxu0
    %772 = vmatprep.subr.bf16.mxu0 0
    %773 = vmatpush1.bf16.msra.mxu0 %v603
    %774 = vmatprep.subr.bf16.mxu0 0
    %775 = vmatpush1.bf16.msra.mxu0 %v602
    %776 = vmatprep.subr.bf16.mxu0 0
    %777 = vmatpush1.bf16.msra.mxu0 %v601
    %778 = vmatprep.subr.bf16.mxu0 0
    %779 = vmatpush1.bf16.msra.mxu0 %v600
    %780 = vmatprep.subr.bf16.mxu0 0
    %781 = vmatpush1.bf16.msra.mxu0 %v599
    %782 = vmatprep.subr.bf16.mxu0 0
    %783 = vmatpush1.bf16.msra.mxu0 %v598
    %784 = vmatprep.subr.bf16.mxu0 0
    %785 = vmatpush1.bf16.msra.mxu0 %v597
    %786 = vmatprep.subr.bf16.mxu0 0
    %787 = vmatpush1.bf16.msra.mxu0 %v596
    %788 = vmatprep.subr.bf16.mxu0 0
    %789 = vmatpush2.bf16.msra.mxu0 %v611
    %790 = vmatprep.subr.bf16.mxu0 0
    %791 = vmatpush2.bf16.msra.mxu0 %v610
    %792 = vmatprep.subr.bf16.mxu0 0
    %793 = vmatpush2.bf16.msra.mxu0 %v609
    %794 = vmatprep.subr.bf16.mxu0 0
    %795 = vmatpush2.bf16.msra.mxu0 %v608
    %796 = vmatprep.subr.bf16.mxu0 0
    %797 = vmatpush2.bf16.msra.mxu0 %v607
    %798 = vmatprep.subr.bf16.mxu0 0
    %799 = vmatpush2.bf16.msra.mxu0 %v606
    %800 = vmatprep.subr.bf16.mxu0 0
    %801 = vmatpush2.bf16.msra.mxu0 %v605
    %802 = vmatprep.subr.bf16.mxu0 0
    %803 = vmatpush2.bf16.msra.mxu0 %v604
    %804 = vmatprep.mubr.bf16.mxu0 %v73
    %805 = vmatmul.mubr.bf16.gmra.mxu0 %v72
    %v806 = vpop.f32.mrf.mxu0
    %v807 = vadd.f32 %v767, %v806
    %v808 = vpop.f32.mrf.mxu0
    %v809 = vpop.f32.mrf.mxu0
    %v810 = vpop.f32.mrf.mxu0
    %811 = vdwg.mxu0
    %812 = vmatprep.subr.bf16.mxu0 0
    %813 = vmatpush1.bf16.msra.mxu0 %v619
    %814 = vmatprep.subr.bf16.mxu0 0
    %815 = vmatpush1.bf16.msra.mxu0 %v618
    %816 = vmatprep.subr.bf16.mxu0 0
    %817 = vmatpush1.bf16.msra.mxu0 %v617
    %818 = vmatprep.subr.bf16.mxu0 0
    %819 = vmatpush1.bf16.msra.mxu0 %v616
    %820 = vmatprep.subr.bf16.mxu0 0
    %821 = vmatpush1.bf16.msra.mxu0 %v615
    %822 = vmatprep.subr.bf16.mxu0 0
    %823 = vmatpush1.bf16.msra.mxu0 %v614
    %824 = vmatprep.subr.bf16.mxu0 0
    %825 = vmatpush1.bf16.msra.mxu0 %v613
    %826 = vmatprep.subr.bf16.mxu0 0
    %827 = vmatpush1.bf16.msra.mxu0 %v612
    %828 = vmatprep.subr.bf16.mxu0 0
    %829 = vmatpush2.bf16.msra.mxu0 %v627
    %830 = vmatprep.subr.bf16.mxu0 0
    %831 = vmatpush2.bf16.msra.mxu0 %v626
    %832 = vmatprep.subr.bf16.mxu0 0
    %833 = vmatpush2.bf16.msra.mxu0 %v625
    %834 = vmatprep.subr.bf16.mxu0 0
    %835 = vmatpush2.bf16.msra.mxu0 %v624
    %836 = vmatprep.subr.bf16.mxu0 0
    %837 = vmatpush2.bf16.msra.mxu0 %v623
    %838 = vmatprep.subr.bf16.mxu0 0
    %839 = vmatpush2.bf16.msra.mxu0 %v622
    %840 = vmatprep.subr.bf16.mxu0 0
    %841 = vmatpush2.bf16.msra.mxu0 %v621
    %842 = vmatprep.subr.bf16.mxu0 0
    %843 = vmatpush2.bf16.msra.mxu0 %v620
    %844 = vmatprep.mubr.bf16.mxu0 %v75
    %845 = vmatmul.mubr.bf16.gmra.mxu0 %v74
    %v846 = vpop.f32.mrf.mxu0
    %v847 = vadd.f32 %v807, %v846
    %v848 = vpop.f32.mrf.mxu0
    %v849 = vpop.f32.mrf.mxu0
    %v850 = vpop.f32.mrf.mxu0
    %851 = vdwg.mxu0
    %v852 = vmax.f32 %v847, 0.0
    %v853 = vpack.c.bf16 %v852, %v852
    %v854 = vld [vmem:[%s4] sm:$0xf]
    %v855 = vld [vmem:[%s4 + $0x4] sm:$0xf]
    %v856 = vld [vmem:[%s4 + $0x8] sm:$0xf]
    %v857 = vld [vmem:[%s4 + $0xc] sm:$0xf]
    %v858 = vld [vmem:[%s5] sm:$0x1]
    %v860 = vlaneseq
    %v861 = vshrl.u32 %v860, 7
    %v862 = vsub.s32 0, %v861
    %v863 = vrot.slane %v858, %v862
    %v869 = vunpack.c.l.b16 %v854
    %v870 = vunpack.c.l.b16 %v855
    %v871 = vunpack.c.l.b16 %v856
    %v872 = vunpack.c.l.b16 %v857
    %v873 = vpack.c.b16 %v870, %v869
    %v874 = vpack.c.b16 %v872, %v871
    %vm877 = vcmask 261120
    %v879 = vsel %vm877, %v853, 0
    %881 = vmatprep.subr.bf16.mxu0 0
    %882 = vmatpush1.bf16.msra.mxu0 0
    %883 = vmatprep.subr.bf16.mxu0 0
    %884 = vmatpush1.bf16.msra.mxu0 0
    %885 = vmatprep.subr.bf16.mxu0 0
    %886 = vmatpush1.bf16.msra.mxu0 0
    %887 = vmatprep.subr.bf16.mxu0 0
    %888 = vmatpush1.bf16.msra.mxu0 0
    %889 = vmatprep.subr.bf16.mxu0 0
    %890 = vmatpush1.bf16.msra.mxu0 0
    %891 = vmatprep.subr.bf16.mxu0 0
    %892 = vmatpush1.bf16.msra.mxu0 0
    %893 = vmatprep.subr.bf16.mxu0 0
    %894 = vmatpush1.bf16.msra.mxu0 %v874
    %895 = vmatprep.subr.bf16.mxu0 0
    %896 = vmatpush1.bf16.msra.mxu0 %v873
    %897 = vmatprep.subr.bf16.mxu0 0
    %898 = vmatpush2.bf16.msra.mxu0 0
    %899 = vmatprep.subr.bf16.mxu0 0
    %900 = vmatpush2.bf16.msra.mxu0 0
    %901 = vmatprep.subr.bf16.mxu0 0
    %902 = vmatpush2.bf16.msra.mxu0 0
    %903 = vmatprep.subr.bf16.mxu0 0
    %904 = vmatpush2.bf16.msra.mxu0 0
    %905 = vmatprep.subr.bf16.mxu0 0
    %906 = vmatpush2.bf16.msra.mxu0 0
    %907 = vmatprep.subr.bf16.mxu0 0
    %908 = vmatpush2.bf16.msra.mxu0 0
    %909 = vmatprep.subr.bf16.mxu0 0
    %910 = vmatpush2.bf16.msra.mxu0 0
    %911 = vmatprep.subr.bf16.mxu0 0
    %912 = vmatpush2.bf16.msra.mxu0 0
    %913 = vmatprep.mubr.bf16.mxu0 0
    %914 = vmatmul.mubr.bf16.gmra.mxu0 %v879
    %v915 = vpop.f32.mrf.mxu0
    %v916 = vadd.f32 %v863, %v915
    %v917 = vpop.f32.mrf.mxu0
    %v918 = vpop.f32.mrf.mxu0
    %v919 = vpop.f32.mrf.mxu0
    %920 = vdwg.mxu0
    %v921 = vmax.f32 %v916, 0.0
    %v922 = vmul.f32 %v916, %v31
    %v923 = vsub.f32 %v921, %v922
    %v924 = vand.u32 2147483647, %v916
    %v925 = vsub.f32 0.0, %v924
    %v926 = vmul.f32 %v925, 1.442695
    %v927 = vpow.pop %v926
    %v928 = vadd.f32 %v927, 1.0
    %v929 = vlog2.pop %v928
    %v930 = vmul.f32 %v929, 0.6931472
    %v931 = vmul.f32 -0.5, %v927
    %v932 = vadd.f32 %v931, 1.0
    %v933 = vmul.f32 %v932, %v927
    %v934 = vand.u32 2147483647, %v927
    %vm935 = vcmp.lt.f32.partialorder %v934, 0.0004427343
    %v936 = vsel %vm935, %v933, %v930
    %v937 = vadd.f32 %v923, %v936
    %v938 = vsub.f32 %v916, %v31
    %v939 = vmul.f32 %v938, %v938
    %v940 = vld [vmem:[%s6] sm:$0x1]
    %v941 = vld [vmem:[%s6 + $0x1] sm:$0x1]
    %v942 = vlaneseq
    %v943 = vshrl.u32 %v942, 7
    %v944 = vsub.s32 0, %v943
    %v945 = vrot.slane %v940, %v944
    %v946 = vmul.f32 %v937, %v945
    %v947 = vlaneseq
    %v948 = vshrl.u32 %v947, 7
    %v949 = vsub.s32 0, %v948
    %v950 = vrot.slane %v941, %v949
    %v951 = vmul.f32 %v939, %v950
    %v952 = vadd.f32 %v946, %v951
    %953 = vset.pattern.permute.xlu0 27
    %954 = vperm.xlu0 %953, %v31
    %v955 = vpop.permute.xlu0 %954
    %v957 = vmul.f32 %v952, %v955
    %vm958 = vcmask 89088
    %v959 = vsel %vm958, %v957, 0.0
    %960 = vadd.xlane.f32.xlu0 %v959
    %v961 = vpop.xlane.xlu0 %960
    %v962 = vrot.slane %v961, 4
    %v963 = vadd.f32 %v961, %v962
    %v964 = vrot.slane %v963, 2
    %v965 = vadd.f32 %v963, %v964
    %v966 = vrot.slane %v965, 1
    %v967 = vadd.f32 %v965, %v966
    %s968 = vtos %v967
    %v969 = vstv %s968
    %970 = vst [vmem:[#allocation2] sm:$0x1] %v969
    // Predicated region
    $region34: #{tpu_custom_call.1} parent=1 // pred_check
      _
    $region35: #{tpu_custom_call.1} parent=1 // pred_check_branch
      %972 = sbr.rel (0) target = $region37
    $region36: #{tpu_custom_call.1} parent=1 // pred_region
      %s974 = ssub.s32 16, 16
      %975 = vsyncadd [#allocation3], %s974
      %s977 = sshll.u32 [#allocation2], 4
      %s978 = int_to_ptr.vmem [resolvable:$true] %s977
      %980 = dma.vmem_to_hbm [thread:$0]  %s978, 16, %s8, [#allocation3]
    $region37: #{tpu_custom_call.1} parent=1 // pred_fallthru
      _
    // Predicated region
    $region38: #{tpu_custom_call.1} parent=1 // pred_check
      _
    $region39: #{tpu_custom_call.1} parent=1 // pred_check_branch
      %982 = sbr.rel (0) target = $region41
    $region40: #{tpu_custom_call.1} parent=1 // pred_region
      %983 = dma.done [#allocation3], 16
    $region41: #{tpu_custom_call.1} parent=1 // pred_fallthru
      _
    %984 = vsyncpa [#allocation3], 1

</llo_original>
